<compile_context>
chip_gen: v5e
topology: v5e:2x2
jax: 0.10.0
libtpu: 0.0.40
codegen_flags: <defaults>
</compile_context>

<pallas_src>
import functools

import jax
import jax.numpy as jnp
from jax import lax
from jax.experimental import pallas as pl
from jax.experimental.pallas import tpu as pltpu

LANE = 128
SUBLANE = 8


def _round_up(n, m):
    return ((n + m - 1) // m) * m


def _pad_nodes(n):
    # node axes: bf16 sublane-pack multiple (16) when small, lane multiple (128)
    # once the dst axis is tiled with TM=128 blocks.
    return _round_up(n, 16) if n <= LANE else _round_up(n, LANE)


def _pad(x, shape):
    return jnp.pad(x, [(0, t - s) for s, t in zip(x.shape, shape)])


# ---------------------------------------------------------------------------
# Kernel 1: fused GCMC encoder for one destination node type.
#
#   out = leaky_relu( ci * sum_r A_r(^T) @ ((cj * feat) @ W_r) ) @ fc_w + fc_b
#
# grid = (num_dst_tiles, R); the rating axis is a VMEM-resident reduction.
# ---------------------------------------------------------------------------
def _gcmc_encode_kernel(a_ref, feat_ref, cj_ref, w_ref, ci_ref, fcw_ref, fcb_ref,
                        out_ref, acc_ref, fsc_ref, *, transpose_a, negative_slope):
    r = pl.program_id(1)

    @pl.when(r == 0)
    def _init():
        # fold src-side 1/sqrt(deg) into the features once per dst tile
        fsc_ref[...] = feat_ref[...] * cj_ref[...]
        acc_ref[...] = jnp.zeros_like(acc_ref)

    # projection: (cj * feat) @ W_r  -> (Nsrc_p, D_p), f32 accumulation on MXU
    proj = jnp.dot(fsc_ref[...], w_ref[0], preferred_element_type=jnp.float32)

    a = a_ref[0].astype(jnp.float32)        # adjacency stored bf16 (exact 0/1)
    if transpose_a:
        # A^T @ proj without materializing A^T: contract A's dim 0 directly.
        agg = lax.dot_general(a, proj, (((0,), (0,)), ((), ())),
                              preferred_element_type=jnp.float32)
    else:
        agg = jnp.dot(a, proj, preferred_element_type=jnp.float32)
    acc_ref[...] += agg

    @pl.when(r == pl.num_programs(1) - 1)
    def _epilogue():
        h = acc_ref[...] * ci_ref[...]                     # dst-side 1/sqrt(deg)
        h = jnp.where(h > 0, h, negative_slope * h)        # agg_act = LeakyReLU(0.1)
        y = jnp.dot(h, fcw_ref[...],
                    preferred_element_type=jnp.float32) + fcb_ref[...]
        out_ref[...] = y.astype(out_ref.dtype)             # out_act = identity


def gcmc_encode(a_stack, feat, cj, ci, w_stack, fc_w, fc_b, *, transpose_a,
                tile_m=128):
    r_dim = a_stack.shape[0]
    if transpose_a:
        nsrc_p, ndst_p = a_stack.shape[1], a_stack.shape[2]
    else:
        ndst_p, nsrc_p = a_stack.shape[1], a_stack.shape[2]
    k_p = feat.shape[1]
    d_p = w_stack.shape[2]
    dout_p = fc_w.shape[1]

    tm = min(tile_m, ndst_p)
    assert ndst_p % tm == 0 and feat.shape[0] == nsrc_p

    if transpose_a:
        a_spec = pl.BlockSpec((1, nsrc_p, tm), lambda i, r: (r, 0, i))
    else:
        a_spec = pl.BlockSpec((1, tm, nsrc_p), lambda i, r: (r, i, 0))

    kernel = functools.partial(_gcmc_encode_kernel, transpose_a=transpose_a,
                               negative_slope=0.1)
    return pl.pallas_call(
        kernel,
        out_shape=jax.ShapeDtypeStruct((ndst_p, dout_p), jnp.float32),
        grid_spec=pltpu.PrefetchScalarGridSpec(
            num_scalar_prefetch=0,
            grid=(ndst_p // tm, r_dim),
            in_specs=[
                a_spec,                                                # A_r tile
                pl.BlockSpec((nsrc_p, k_p), lambda i, r: (0, 0)),      # feat (resident)
                pl.BlockSpec((nsrc_p, 1), lambda i, r: (0, 0)),        # cj (src norm)
                pl.BlockSpec((1, k_p, d_p), lambda i, r: (r, 0, 0)),   # W_r
                pl.BlockSpec((tm, 1), lambda i, r: (i, 0)),            # ci (dst norm)
                pl.BlockSpec((d_p, dout_p), lambda i, r: (0, 0)),      # fc weight
                pl.BlockSpec((1, dout_p), lambda i, r: (0, 0)),        # fc bias
            ],
            out_specs=pl.BlockSpec((tm, dout_p), lambda i, r: (i, 0)),
            scratch_shapes=[pltpu.VMEM((tm, d_p), jnp.float32),        # accumulator
                            pltpu.VMEM((nsrc_p, k_p), jnp.float32)]),  # cj*feat
        compiler_params=pltpu.CompilerParams(
            dimension_semantics=("parallel", "arbitrary"),
            vmem_limit_bytes=32 * 1024 * 1024),
    )(a_stack, feat, cj, w_stack, ci, fc_w, fc_b)


# ---------------------------------------------------------------------------
# Kernel 2: DenseBiDecoder, tiled over edges.
#   s[a,b]   = sum_ij u[a,i] P[b,i,j] v[a,j]   (one wide matmul + lane reduce)
#   pred     = s @ Wc
# ---------------------------------------------------------------------------
def _bidecoder_kernel(u_ref, v_ref, pw_ref, wc_ref, out_ref):
    u = u_ref[...]                                   # (TE, D_p)
    v = v_ref[...]                                   # (TE, D_p)
    te, d_p = u.shape
    nb = wc_ref.shape[0]
    # one wide MXU matmul over all stacked basis matrices: (TE, nb*D_p)
    t = jnp.dot(u, pw_ref[...], preferred_element_type=jnp.float32)
    t = t.reshape(te, nb, d_p)
    s = jnp.sum(t * v[:, None, :], axis=2)           # (TE, nb)
    pred = jnp.dot(s, wc_ref[...], preferred_element_type=jnp.float32)
    out_ref[...] = pred.astype(out_ref.dtype)


def bidecoder(u, v, p_wide, wc, *, tile_e=128):
    e_p, d_p = u.shape
    nb, c_p = wc.shape
    te = min(tile_e, e_p)
    assert e_p % te == 0 and p_wide.shape == (d_p, nb * d_p)
    return pl.pallas_call(
        _bidecoder_kernel,
        out_shape=jax.ShapeDtypeStruct((e_p, c_p), jnp.float32),
        grid_spec=pltpu.PrefetchScalarGridSpec(
            num_scalar_prefetch=0,
            grid=(e_p // te,),
            in_specs=[
                pl.BlockSpec((te, d_p), lambda e: (e, 0)),
                pl.BlockSpec((te, d_p), lambda e: (e, 0)),
                pl.BlockSpec((d_p, nb * d_p), lambda e: (0, 0)),
                pl.BlockSpec((nb, c_p), lambda e: (0, 0)),
            ],
            out_specs=pl.BlockSpec((te, c_p), lambda e: (e, 0))),
        compiler_params=pltpu.CompilerParams(
            dimension_semantics=("parallel",),
            vmem_limit_bytes=32 * 1024 * 1024),
    )(u, v, p_wide, wc)


# ---------------------------------------------------------------------------
# Input preparation: pad / stack the "natural" GCMC tensors to TPU-friendly
# shapes once (lane dims -> multiples of 128, node/edge dims -> tile multiples).
# ---------------------------------------------------------------------------
def prepare_inputs(params, adjs, cj_u, ci_u, cj_m, ci_m, ufeat, ifeat, edges):
    nu, nm = adjs[0].shape
    ku, km = ufeat.shape[1], ifeat.shape[1]
    d_agg = params["W_r"][0].shape[1]
    d_out = params["ufc_w"].shape[1]
    nb = params["P"].shape[0]
    n_cls = params["Wc"].shape[1]

    nu_p, nm_p = _pad_nodes(nu), _pad_nodes(nm)
    ku_p, km_p = _round_up(ku, LANE), _round_up(km, LANE)
    dagg_p = _round_up(d_agg, LANE)
    dout_p = _round_up(d_out, LANE)
    c_p = _round_up(n_cls, LANE)

    prep = {
        # stacked per-rating adjacency in bf16 (exact for binary entries)
        "a_stack": jnp.stack([_pad(a, (nu_p, nm_p)) for a in adjs]
                             ).astype(jnp.bfloat16),
        "ufeat": _pad(ufeat, (nu_p, ku_p)),
        "ifeat": _pad(ifeat, (nm_p, km_p)),
        "cj_u": _pad(cj_u, (nu_p, 1)),
        "ci_u": _pad(ci_u, (nu_p, 1)),
        "cj_m": _pad(cj_m, (nm_p, 1)),
        "ci_m": _pad(ci_m, (nm_p, 1)),
        "w_fwd": jnp.stack([_pad(w, (ku_p, dagg_p)) for w in params["W_r"]]),
        "w_rev": jnp.stack([_pad(w, (km_p, dagg_p)) for w in params["W_rev"]]),
        "ufc_w": _pad(params["ufc_w"], (dagg_p, dout_p)),
        "ufc_b": _pad(params["ufc_b"], (1, dout_p)),
        "ifc_w": _pad(params["ifc_w"], (dagg_p, dout_p)),
        "ifc_b": _pad(params["ifc_b"], (1, dout_p)),
        "wc": _pad(params["Wc"], (nb, c_p)),
        "num_classes": n_cls,
    }

    # decoder basis matrices laid out lane-major: [P_0 | P_1 | ...]
    p_pad = _pad(params["P"], (nb, dout_p, dout_p))
    prep["p_wide"] = jnp.transpose(p_pad, (1, 0, 2)).reshape(dout_p, nb * dout_p)

    # edge endpoints, concatenated over rating values (same order as torch.cat)
    head_idx = jnp.concatenate([h for h, _ in edges]).astype(jnp.int32)
    tail_idx = jnp.concatenate([t for _, t in edges]).astype(jnp.int32)
    e = head_idx.shape[0]
    te = min(LANE, _round_up(e, SUBLANE))
    e_p = _round_up(e, te)
    prep["head_idx"] = jnp.pad(head_idx, (0, e_p - e))
    prep["tail_idx"] = jnp.pad(tail_idx, (0, e_p - e))
    prep["num_edges"] = e
    return prep


# ---------------------------------------------------------------------------
# Full Net forward.
# ---------------------------------------------------------------------------
def net_forward(prep):
    # user_out:  dst = users,  src = movies, uses A_r   and W_rev_r, ufc
    user_out = gcmc_encode(prep["a_stack"], prep["ifeat"], prep["cj_m"],
                           prep["ci_u"], prep["w_rev"], prep["ufc_w"],
                           prep["ufc_b"], transpose_a=False)
    # movie_out: dst = movies, src = users,  uses A_r^T and W_r, ifc
    movie_out = gcmc_encode(prep["a_stack"], prep["ufeat"], prep["cj_u"],
                            prep["ci_m"], prep["w_fwd"], prep["ifc_w"],
                            prep["ifc_b"], transpose_a=True)

    # TODO(synk): the edge-endpoint gather could be folded into the decoder's
    # input DMA via PrefetchScalarGridSpec + pl.Element row gather; kept as a
    # single XLA take per side here.
    head_emb = jnp.take(user_out, prep["head_idx"], axis=0)
    tail_emb = jnp.take(movie_out, prep["tail_idx"], axis=0)

    pred = bidecoder(head_emb, tail_emb, prep["p_wide"], prep["wc"])
    return pred[:prep["num_edges"], :prep["num_classes"]]


# ---------------------------------------------------------------------------
# Pure-JAX reference (mirrors the PyTorch semantics) for a numerical check.
# ---------------------------------------------------------------------------
def reference_forward(params, adjs, cj_u, ci_u, cj_m, ci_m, ufeat, ifeat, edges):
    def leaky(x):
        return jnp.where(x > 0, x, 0.1 * x)

    user_agg = 0.0
    movie_agg = 0.0
    for r, a in enumerate(adjs):
        movie_agg = movie_agg + ci_m * (a.T @ (cj_u * (ufeat @ params["W_r"][r])))
        user_agg = user_agg + ci_u * (a @ (cj_m * (ifeat @ params["W_rev"][r])))
    user_out = leaky(user_agg) @ params["ufc_w"] + params["ufc_b"]
    movie_out = leaky(movie_agg) @ params["ifc_w"] + params["ifc_b"]
    head = jnp.concatenate([user_out[h] for h, _ in edges], axis=0)
    tail = jnp.concatenate([movie_out[t] for _, t in edges], axis=0)
    s = jnp.einsum("ai,bij,aj->ab", head, params["P"], tail)
    return s @ params["Wc"]


if __name__ == "__main__":
    # ---- small deterministic config ----
    rating_vals = [1, 2, 3]
    R = len(rating_vals)
    num_users, num_movies = 8, 16
    src_in_units, dst_in_units = 24, 32      # user / movie input feature dims
    gcn_agg_units, gcn_out_units = 32, 16
    num_basis = 2
    num_classes = R
    edges_per_rating = 4

    key = jax.random.PRNGKey(0)
    ks = jax.random.split(key, 16)

    ufeat = jax.random.normal(ks[0], (num_users, src_in_units), jnp.float32)
    ifeat = jax.random.normal(ks[1], (num_movies, dst_in_units), jnp.float32)

    # per-rating dense adjacency (frontier graph)
    adjs = [(jax.random.uniform(ks[2 + r], (num_users, num_movies)) < 0.3
             ).astype(jnp.float32) for r in range(R)]
    deg_u = sum(a.sum(axis=1) for a in adjs)
    deg_m = sum(a.sum(axis=0) for a in adjs)
    cj_u = (1.0 / jnp.sqrt(jnp.maximum(deg_u, 1.0))).reshape(num_users, 1)
    cj_m = (1.0 / jnp.sqrt(jnp.maximum(deg_m, 1.0))).reshape(num_movies, 1)
    ci_u, ci_m = cj_u, cj_m

    # compact_g edges per rating value (head = user idx, tail = movie idx)
    edges = []
    for r in range(R):
        h = jax.random.randint(ks[6 + r], (edges_per_rating,), 0, num_users)
        t = jax.random.randint(ks[9 + r], (edges_per_rating,), 0, num_movies)
        edges.append((h, t))

    # ---- deterministic parameters (shapes follow GCMCLayer / DenseBiDecoder) ----
    pk = jax.random.split(jax.random.PRNGKey(1), 12)
    params = {
        "W_r":   [0.1 * jax.random.normal(pk[r], (src_in_units, gcn_agg_units), jnp.float32)
                  for r in range(R)],
        "W_rev": [0.1 * jax.random.normal(pk[3 + r], (dst_in_units, gcn_agg_units), jnp.float32)
                  for r in range(R)],
        "ufc_w": 0.1 * jax.random.normal(pk[6], (gcn_agg_units, gcn_out_units), jnp.float32),
        "ufc_b": jnp.zeros((1, gcn_out_units), jnp.float32),
        "ifc_w": 0.1 * jax.random.normal(pk[7], (gcn_agg_units, gcn_out_units), jnp.float32),
        "ifc_b": jnp.zeros((1, gcn_out_units), jnp.float32),
        "P":     0.1 * jax.random.normal(pk[8], (num_basis, gcn_out_units, gcn_out_units), jnp.float32),
        "Wc":    0.1 * jax.random.normal(pk[9], (num_basis, num_classes), jnp.float32),
    }

    prep = prepare_inputs(params, adjs, cj_u, ci_u, cj_m, ci_m, ufeat, ifeat, edges)
    pred_ratings = net_forward(prep)
    pred_ratings = jax.block_until_ready(pred_ratings)

    assert pred_ratings.shape == (edges_per_rating * R, num_classes)
    assert bool(jnp.all(jnp.isfinite(pred_ratings)))

    ref = reference_forward(params, adjs, cj_u, ci_u, cj_m, ci_m, ufeat, ifeat, edges)
    max_err = float(jnp.max(jnp.abs(pred_ratings - ref)))
    assert max_err < 1e-2, f"mismatch vs pure-JAX reference: {max_err}"

    print("KERNEL_OK")
</pallas_src>

<mosaic_0001>
module attributes {stable_mosaic.version = 11 : i64} {
  func.func @_gcmc_encode_kernel(%arg0: i32, %arg1: i32, %arg2: memref<1x16x16xbf16, #tpu.memory_space<vmem>>, %arg3: memref<16x128xf32, #tpu.memory_space<vmem>>, %arg4: memref<16x1xf32, #tpu.memory_space<vmem>>, %arg5: memref<1x128x128xf32, #tpu.memory_space<vmem>>, %arg6: memref<16x1xf32, #tpu.memory_space<vmem>>, %arg7: memref<128x128xf32, #tpu.memory_space<vmem>>, %arg8: memref<1x128xf32, #tpu.memory_space<vmem>>, %arg9: memref<16x128xf32, #tpu.memory_space<vmem>>, %arg10: memref<16x128xf32, #tpu.memory_space<vmem>>, %arg11: memref<16x128xf32, #tpu.memory_space<vmem>>) attributes {dimension_semantics = [#tpu.dimension_semantics<parallel>, #tpu.dimension_semantics<arbitrary>], iteration_bounds = array<i64: 1, 3>, scalar_prefetch = 0 : i64, scratch_operands = 2 : i64, tpu.core_type = #tpu.core_type<tc>, window_params = [{transform_indices = @transform_0, window_bounds = array<i64: 1, 16, 16>}, {pipeline_mode = #tpu.pipeline_mode<synchronous>, transform_indices = @transform_1, window_bounds = array<i64: 16, 128>}, {pipeline_mode = #tpu.pipeline_mode<synchronous>, transform_indices = @transform_2, window_bounds = array<i64: 16, 1>}, {transform_indices = @transform_3, window_bounds = array<i64: 1, 128, 128>}, {transform_indices = @transform_4, window_bounds = array<i64: 16, 1>}, {pipeline_mode = #tpu.pipeline_mode<synchronous>, transform_indices = @transform_5, window_bounds = array<i64: 128, 128>}, {pipeline_mode = #tpu.pipeline_mode<synchronous>, transform_indices = @transform_6, window_bounds = array<i64: 1, 128>}, {transform_indices = @transform_7, window_bounds = array<i64: 16, 128>}]} {
    %c0_i32 = arith.constant 0 : i32
    %0 = arith.cmpi eq, %arg1, %c0_i32 : i32
    %1 = arith.extui %0 : i1 to i32
    %c0_i32_0 = arith.constant 0 : i32
    %2 = arith.cmpi ne, %1, %c0_i32_0 : i32
    scf.if %2 {
      %c0_14 = arith.constant 0 : index
      %c0_15 = arith.constant 0 : index
      %17 = vector.load %arg3[%c0_14, %c0_15] : memref<16x128xf32, #tpu.memory_space<vmem>>, vector<16x128xf32>
      %c0_16 = arith.constant 0 : index
      %c0_17 = arith.constant 0 : index
      %18 = vector.load %arg4[%c0_16, %c0_17] : memref<16x1xf32, #tpu.memory_space<vmem>>, vector<16x1xf32>
      %19 = vector.broadcast %18 : vector<16x1xf32> to vector<16x128xf32>
      %20 = arith.mulf %17, %19 : vector<16x128xf32>
      %c0_18 = arith.constant 0 : index
      %c0_19 = arith.constant 0 : index
      %21 = vector.load %arg11[%c0_18, %c0_19] : memref<16x128xf32, #tpu.memory_space<vmem>>, vector<16x128xf32>
      tpu.vector_store %arg11[%c0_18, %c0_19], %20 {strides = array<i32>} : memref<16x128xf32, #tpu.memory_space<vmem>>, vector<16x128xf32>,
      %cst_20 = arith.constant 0.000000e+00 : f32
      %22 = vector.broadcast %cst_20 : f32 to vector<16x128xf32>
      %c0_21 = arith.constant 0 : index
      %c0_22 = arith.constant 0 : index
      %23 = vector.load %arg10[%c0_21, %c0_22] : memref<16x128xf32, #tpu.memory_space<vmem>>, vector<16x128xf32>
      tpu.vector_store %arg10[%c0_21, %c0_22], %22 {strides = array<i32>} : memref<16x128xf32, #tpu.memory_space<vmem>>, vector<16x128xf32>,
    } else {
    }
    %c0 = arith.constant 0 : index
    %c0_1 = arith.constant 0 : index
    %3 = vector.load %arg11[%c0, %c0_1] : memref<16x128xf32, #tpu.memory_space<vmem>>, vector<16x128xf32>
    %c0_2 = arith.constant 0 : index
    %c0_3 = arith.constant 0 : index
    %c0_4 = arith.constant 0 : index
    %4 = vector.load %arg5[%c0_2, %c0_3, %c0_4] : memref<1x128x128xf32, #tpu.memory_space<vmem>>, vector<1x128x128xf32>
    %5 = vector.shape_cast %4 : vector<1x128x128xf32> to vector<128x128xf32>
    %cst = arith.constant dense<0.000000e+00> : vector<16x128xf32>
    %6 = tpu.matmul %3, %5, %cst {dimension_numbers = #tpu.dot_dimension_numbers<[1], [0], [0], [1], [0, 0, 1, 1], [], []>} : vector<16x128xf32>, vector<128x128xf32>, vector<16x128xf32> -> vector<16x128xf32>
    %c0_5 = arith.constant 0 : index
    %c0_6 = arith.constant 0 : index
    %c0_7 = arith.constant 0 : index
    %7 = vector.load %arg2[%c0_5, %c0_6, %c0_7] : memref<1x16x16xbf16, #tpu.memory_space<vmem>>, vector<1x16x16xbf16>
    %8 = vector.shape_cast %7 : vector<1x16x16xbf16> to vector<16x16xbf16>
    %9 = arith.extf %8 : vector<16x16xbf16> to vector<16x16xf32>
    %cst_8 = arith.constant dense<0.000000e+00> : vector<16x128xf32>
    %10 = tpu.matmul %9, %6, %cst_8 {dimension_numbers = #tpu.dot_dimension_numbers<[1], [0], [0], [1], [0, 0, 1, 1], [], []>} : vector<16x16xf32>, vector<16x128xf32>, vector<16x128xf32> -> vector<16x128xf32>
    %c0_9 = arith.constant 0 : index
    %c0_10 = arith.constant 0 : index
    %11 = vector.load %arg10[%c0_9, %c0_10] : memref<16x128xf32, #tpu.memory_space<vmem>>, vector<16x128xf32>
    %12 = arith.addf %11, %10 : vector<16x128xf32>
    %c0_11 = arith.constant 0 : index
    %c0_12 = arith.constant 0 : index
    %13 = vector.load %arg10[%c0_11, %c0_12] : memref<16x128xf32, #tpu.memory_space<vmem>>, vector<16x128xf32>
    tpu.vector_store %arg10[%c0_11, %c0_12], %12 {strides = array<i32>} : memref<16x128xf32, #tpu.memory_space<vmem>>, vector<16x128xf32>,
    %c2_i32 = arith.constant 2 : i32
    %14 = arith.cmpi eq, %arg1, %c2_i32 : i32
    %15 = arith.extui %14 : i1 to i32
    %c0_i32_13 = arith.constant 0 : i32
    %16 = arith.cmpi ne, %15, %c0_i32_13 : i32
    scf.if %16 {
      %c0_14 = arith.constant 0 : index
      %c0_15 = arith.constant 0 : index
      %17 = vector.load %arg10[%c0_14, %c0_15] : memref<16x128xf32, #tpu.memory_space<vmem>>, vector<16x128xf32>
      %c0_16 = arith.constant 0 : index
      %c0_17 = arith.constant 0 : index
      %18 = vector.load %arg6[%c0_16, %c0_17] : memref<16x1xf32, #tpu.memory_space<vmem>>, vector<16x1xf32>
      %19 = vector.broadcast %18 : vector<16x1xf32> to vector<16x128xf32>
      %20 = arith.mulf %17, %19 : vector<16x128xf32>
      %cst_18 = arith.constant 0.000000e+00 : f32
      %21 = vector.broadcast %cst_18 : f32 to vector<16x128xf32>
      %22 = arith.cmpf ogt, %20, %21 : vector<16x128xf32>
      %cst_19 = arith.constant 1.000000e-01 : f32
      %23 = vector.broadcast %cst_19 : f32 to vector<16x128xf32>
      %24 = arith.mulf %23, %20 : vector<16x128xf32>
      %25 = arith.select %22, %20, %24 : vector<16x128xi1>, vector<16x128xf32>
      %c0_20 = arith.constant 0 : index
      %c0_21 = arith.constant 0 : index
      %26 = vector.load %arg7[%c0_20, %c0_21] : memref<128x128xf32, #tpu.memory_space<vmem>>, vector<128x128xf32>
      %cst_22 = arith.constant dense<0.000000e+00> : vector<16x128xf32>
      %27 = tpu.matmul %25, %26, %cst_22 {dimension_numbers = #tpu.dot_dimension_numbers<[1], [0], [0], [1], [0, 0, 1, 1], [], []>} : vector<16x128xf32>, vector<128x128xf32>, vector<16x128xf32> -> vector<16x128xf32>
      %c0_23 = arith.constant 0 : index
      %c0_24 = arith.constant 0 : index
      %28 = vector.load %arg8[%c0_23, %c0_24] : memref<1x128xf32, #tpu.memory_space<vmem>>, vector<1x128xf32>
      %29 = vector.broadcast %28 : vector<1x128xf32> to vector<16x128xf32>
      %30 = arith.addf %27, %29 : vector<16x128xf32>
      %c0_25 = arith.constant 0 : index
      %c0_26 = arith.constant 0 : index
      %31 = vector.load %arg9[%c0_25, %c0_26] : memref<16x128xf32, #tpu.memory_space<vmem>>, vector<16x128xf32>
      tpu.vector_store %arg9[%c0_25, %c0_26], %30 {strides = array<i32>} : memref<16x128xf32, #tpu.memory_space<vmem>>, vector<16x128xf32>,
    } else {
    }
    return
  }
  func.func @transform_0(%arg0: i32, %arg1: i32) -> (i32, i32, i32) {
    %c0_i32 = arith.constant 0 : i32
    %c0_i32_0 = arith.constant 0 : i32
    return %arg1, %arg0, %c0_i32 : i32, i32, i32
  }
  func.func @transform_1(%arg0: i32, %arg1: i32) -> (i32, i32) {
    %c0_i32 = arith.constant 0 : i32
    %c0_i32_0 = arith.constant 0 : i32
    %c0_i32_1 = arith.constant 0 : i32
    return %c0_i32, %c0_i32_0 : i32, i32
  }
  func.func @transform_2(%arg0: i32, %arg1: i32) -> (i32, i32) {
    %c0_i32 = arith.constant 0 : i32
    %c0_i32_0 = arith.constant 0 : i32
    %c0_i32_1 = arith.constant 0 : i32
    return %c0_i32, %c0_i32_0 : i32, i32
  }
  func.func @transform_3(%arg0: i32, %arg1: i32) -> (i32, i32, i32) {
    %c0_i32 = arith.constant 0 : i32
    %c0_i32_0 = arith.constant 0 : i32
    %c0_i32_1 = arith.constant 0 : i32
    return %arg1, %c0_i32, %c0_i32_0 : i32, i32, i32
  }
  func.func @transform_4(%arg0: i32, %arg1: i32) -> (i32, i32) {
    %c0_i32 = arith.constant 0 : i32
    %c0_i32_0 = arith.constant 0 : i32
    return %arg0, %c0_i32 : i32, i32
  }
  func.func @transform_5(%arg0: i32, %arg1: i32) -> (i32, i32) {
    %c0_i32 = arith.constant 0 : i32
    %c0_i32_0 = arith.constant 0 : i32
    %c0_i32_1 = arith.constant 0 : i32
    return %c0_i32, %c0_i32_0 : i32, i32
  }
  func.func @transform_6(%arg0: i32, %arg1: i32) -> (i32, i32) {
    %c0_i32 = arith.constant 0 : i32
    %c0_i32_0 = arith.constant 0 : i32
    %c0_i32_1 = arith.constant 0 : i32
    return %c0_i32, %c0_i32_0 : i32, i32
  }
  func.func @transform_7(%arg0: i32, %arg1: i32) -> (i32, i32) {
    %c0_i32 = arith.constant 0 : i32
    %c0_i32_0 = arith.constant 0 : i32
    return %arg0, %c0_i32 : i32, i32
  }
}

</mosaic_0001>

<llo_original>
// kernel: tpu_custom_call.1
$region0: #{tpu_custom_call.1}
  #allocation0 [shape = 'u32[]', space=smem, size = 0x4, offset = 0x4, fixed_abs, tag = 'smem constant byte address 0x4 - core index']
  #allocation1 [shape = 'u32[72,128]{1,0:T(1,128)}', space=vmem, size = 0x9000, scoped, tag = 'internal scratch']
  #allocation2 [shape = 'f32[16,128]{1,0:T(8,128)}', space=vmem, size = 0x2000, scoped, tag = 'scratch operand']
  #allocation3 [shape = 'f32[16,128]{1,0:T(8,128)}', space=vmem, size = 0x2000, scoped, tag = 'scratch operand']
  %s0 = inlined_call_operand.vmem [shape: bf16[3,16,16], index: 0, kind: input, shape index: {}]
  %s1 = inlined_call_operand.hbm [shape: f32[16,128], index: 1, kind: input, shape index: {}]
  %s2 = inlined_call_operand.vmem [shape: f32[16,1], index: 2, kind: input, shape index: {}]
  %s3 = inlined_call_operand.hbm [shape: f32[3,128,128], index: 3, kind: input, shape index: {}]
  %s4 = inlined_call_operand.vmem [shape: f32[16,1], index: 4, kind: input, shape index: {}]
  %s5 = inlined_call_operand.hbm [shape: f32[128,128], index: 5, kind: input, shape index: {}]
  %s6 = inlined_call_operand.vmem [shape: f32[1,128], index: 6, kind: input, shape index: {}]
  %s7 = inlined_call_operand.hbm [shape: f32[16,128], index: 7, kind: output, shape index: {}]
  %s8 = sld [smem:[#allocation0]]
  $region81: #{tpu_custom_call.1} parent=0
    _
  %s10 = ssub.s32 1, %s8
  %s11 = scalar_select 0, %s10, %s8
  $region1: #{tpu_custom_call.1} parent=0
    #allocation4 [shape = 'u8[8192]{0}', space=vmem, size = 0x2000, scoped, tag = 'input window, operand 1, single buffered']
    #allocation5 [shape = 's32[2]{0}', space=sflag, size = 0x8, scoped, tag = 'scoped memory for tpu_custom_call.1']
    #allocation6 [shape = 's32[2]{0}', space=sflag, size = 0x8, scoped, tag = 'scoped memory for tpu_custom_call.1']
    #allocation7 [shape = 'u8[131072]{0}', space=vmem, size = 0x20000, scoped, tag = 'input window, operand 3']
    #allocation8 [shape = 's32[2]{0}', space=sflag, size = 0x8, scoped, tag = 'scoped memory for tpu_custom_call.1']
    #allocation9 [shape = 'u8[65536]{0}', space=vmem, size = 0x10000, scoped, tag = 'input window, operand 5, single buffered']
    #allocation10 [shape = 'u8[8192]{0}', space=vmem, size = 0x2000, scoped, tag = 'output window, operand 0, single buffered']
    %12 = vsyncpa [#allocation5], 0
    %13 = vsyncpa [#allocation8], 0
    %s14 = scalar_lea.sflag [#allocation8], 1
    %15 = vsyncpa %s14, 0
    %16 = vsyncpa [#allocation6], 0
    loop: start=0, step=1, limit=5
    $region2: #{tpu_custom_call.1} parent=1 // loop_pre_header
      _
    $region3: #{tpu_custom_call.1} parent=1 // loop_header
      %s18 = sphi 0, %s22
      %p19 = scmp.ge.s32.totalorder %s18, 5
      %s25 = sphi 0, %s37
      %s26 = sphi 0, %s33
      %s27 = sphi 0, %s25
      %s28 = sphi 0, %s26
      %s29 = sphi 0, %s27
      %s30 = sphi 0, %s28
      %s42 = sphi 0, %s44
      %s45 = sphi 0, %s42
      %s46 = sphi 0, %s45
      %s62 = sphi 0, %s46
      %s66 = sphi 0, %s66
      %s68 = sphi 0, %s66
      %s69 = sphi 0, %s68
      %s83 = sphi 0, %s69
      %s87 = sphi 0, %s87
      %s89 = sphi 0, %s87
      %s90 = sphi 0, %s89
      %s104 = sphi 0, %s90
      %s110 = sphi 0, %s112
      %s113 = sphi 0, %s110
      %s114 = sphi 0, %s113
      %s130 = sphi 0, %s114
      %s136 = sphi 0, %s138
      %s139 = sphi 0, %s136
      %s140 = sphi 0, %s139
      %s156 = sphi 0, %s140
      %s160 = sphi 0, %s160
      %s162 = sphi 0, %s160
      %s163 = sphi 0, %s162
      %s177 = sphi 0, %s163
      %s181 = sphi 0, %s181
      %s183 = sphi 0, %s181
      %s184 = sphi 0, %s183
      %s198 = sphi 0, %s184
      %s204 = sphi 0, %s206
      %s207 = sphi 0, %s204
      %s208 = sphi 0, %s207
      %s224 = sphi 0, %s208
    $region4: #{tpu_custom_call.1} parent=1 // loop_header_branch
      %21 = sbr.rel (%p19) target = $region8
    $region5: #{tpu_custom_call.1} parent=1 // loop_body
      %s23 = ssub.s32 %s18, 1
      %s24 = ssub.s32 %s18, 2
      %s31 = sadd.s32 1, %s26
      %p32 = scmp.ge.s32.totalorder %s31, 3
      %s33 = scalar_select %p32, 0, %s31
      %s34 = sadd.s32 1, %s25
      %s35 = scalar_select %p32, %s34, %s25
      %p36 = scmp.ge.s32.totalorder %s35, 1
      %s37 = scalar_select %p36, 0, %s35
      %s38 = ssub.s32 %s26, %s33
      %s39 = ssub.s32 %s25, %s37
      %s40 = sor.u32 %s38, %s39
      %p41 = scmp.eq.s32.totalorder %s40, 0
      %s43 = sadd.s32 %s42, 1
      %s44 = scalar_select %p41, %s42, %s43
      %p47 = pneg %p41
      %p48 = scmp.eq.s32.totalorder %s18, 2
      %p49 = por %p47, %p48
      %p50 = scmp.ne.s32.totalorder %s42, %s45
      %p51 = scmp.eq.s32.totalorder %s18, 0
      %p52 = por %p50, %p51
      %p53 = scmp.ne.s32.totalorder %s42, %s45
      %p54 = scmp.eq.s32.totalorder %s23, 2
      %p55 = por %p53, %p54
      %p56 = scmp.ne.s32.totalorder %s45, %s46
      %p57 = scmp.eq.s32.totalorder %s23, 0
      %p58 = por %p56, %p57
      %p59 = scmp.ne.s32.totalorder %s45, %s46
      %p60 = scmp.eq.s32.totalorder %s24, 2
      %p61 = por %p59, %p60
      %p63 = scmp.ne.s32.totalorder %s46, %s62
      %p64 = scmp.eq.s32.totalorder %s24, 0
      %p65 = por %p63, %p64
      %s67 = sadd.s32 %s66, 1
      %p70 = scmp.eq.s32.totalorder %s18, 2
      %p71 = scmp.ne.s32.totalorder %s66, %s68
      %p72 = scmp.eq.s32.totalorder %s18, 0
      %p73 = por %p71, %p72
      %p74 = scmp.ne.s32.totalorder %s66, %s68
      %p75 = scmp.eq.s32.totalorder %s23, 2
      %p76 = por %p74, %p75
      %p77 = scmp.ne.s32.totalorder %s68, %s69
      %p78 = scmp.eq.s32.totalorder %s23, 0
      %p79 = por %p77, %p78
      %p80 = scmp.ne.s32.totalorder %s68, %s69
      %p81 = scmp.eq.s32.totalorder %s24, 2
      %p82 = por %p80, %p81
      %p84 = scmp.ne.s32.totalorder %s69, %s83
      %p85 = scmp.eq.s32.totalorder %s24, 0
      %p86 = por %p84, %p85
      %s88 = sadd.s32 %s87, 1
      %p91 = scmp.eq.s32.totalorder %s18, 2
      %p92 = scmp.ne.s32.totalorder %s87, %s89
      %p93 = scmp.eq.s32.totalorder %s18, 0
      %p94 = por %p92, %p93
      %p95 = scmp.ne.s32.totalorder %s87, %s89
      %p96 = scmp.eq.s32.totalorder %s23, 2
      %p97 = por %p95, %p96
      %p98 = scmp.ne.s32.totalorder %s89, %s90
      %p99 = scmp.eq.s32.totalorder %s23, 0
      %p100 = por %p98, %p99
      %p101 = scmp.ne.s32.totalorder %s89, %s90
      %p102 = scmp.eq.s32.totalorder %s24, 2
      %p103 = por %p101, %p102
      %p105 = scmp.ne.s32.totalorder %s90, %s104
      %p106 = scmp.eq.s32.totalorder %s24, 0
      %p107 = por %p105, %p106
      %s108 = ssub.s32 %s26, %s33
      %p109 = scmp.eq.s32.totalorder %s108, 0
      %s111 = sadd.s32 %s110, 1
      %s112 = scalar_select %p109, %s110, %s111
      %p115 = pneg %p109
      %p116 = scmp.eq.s32.totalorder %s18, 2
      %p117 = por %p115, %p116
      %p118 = scmp.ne.s32.totalorder %s110, %s113
      %p119 = scmp.eq.s32.totalorder %s18, 0
      %p120 = por %p118, %p119
      %p121 = scmp.ne.s32.totalorder %s110, %s113
      %p122 = scmp.eq.s32.totalorder %s23, 2
      %p123 = por %p121, %p122
      %p124 = scmp.ne.s32.totalorder %s113, %s114
      %p125 = scmp.eq.s32.totalorder %s23, 0
      %p126 = por %p124, %p125
      %p127 = scmp.ne.s32.totalorder %s113, %s114
      %p128 = scmp.eq.s32.totalorder %s24, 2
      %p129 = por %p127, %p128
      %p131 = scmp.ne.s32.totalorder %s114, %s130
      %p132 = scmp.eq.s32.totalorder %s24, 0
      %p133 = por %p131, %p132
      %s134 = ssub.s32 %s25, %s37
      %p135 = scmp.eq.s32.totalorder %s134, 0
      %s137 = sadd.s32 %s136, 1
      %s138 = scalar_select %p135, %s136, %s137
      %p141 = pneg %p135
      %p142 = scmp.eq.s32.totalorder %s18, 2
      %p143 = por %p141, %p142
      %p144 = scmp.ne.s32.totalorder %s136, %s139
      %p145 = scmp.eq.s32.totalorder %s18, 0
      %p146 = por %p144, %p145
      %p147 = scmp.ne.s32.totalorder %s136, %s139
      %p148 = scmp.eq.s32.totalorder %s23, 2
      %p149 = por %p147, %p148
      %p150 = scmp.ne.s32.totalorder %s139, %s140
      %p151 = scmp.eq.s32.totalorder %s23, 0
      %p152 = por %p150, %p151
      %p153 = scmp.ne.s32.totalorder %s139, %s140
      %p154 = scmp.eq.s32.totalorder %s24, 2
      %p155 = por %p153, %p154
      %p157 = scmp.ne.s32.totalorder %s140, %s156
      %p158 = scmp.eq.s32.totalorder %s24, 0
      %p159 = por %p157, %p158
      %s161 = sadd.s32 %s160, 1
      %p164 = scmp.eq.s32.totalorder %s18, 2
      %p165 = scmp.ne.s32.totalorder %s160, %s162
      %p166 = scmp.eq.s32.totalorder %s18, 0
      %p167 = por %p165, %p166
      %p168 = scmp.ne.s32.totalorder %s160, %s162
      %p169 = scmp.eq.s32.totalorder %s23, 2
      %p170 = por %p168, %p169
      %p171 = scmp.ne.s32.totalorder %s162, %s163
      %p172 = scmp.eq.s32.totalorder %s23, 0
      %p173 = por %p171, %p172
      %p174 = scmp.ne.s32.totalorder %s162, %s163
      %p175 = scmp.eq.s32.totalorder %s24, 2
      %p176 = por %p174, %p175
      %p178 = scmp.ne.s32.totalorder %s163, %s177
      %p179 = scmp.eq.s32.totalorder %s24, 0
      %p180 = por %p178, %p179
      %s182 = sadd.s32 %s181, 1
      %p185 = scmp.eq.s32.totalorder %s18, 2
      %p186 = scmp.ne.s32.totalorder %s181, %s183
      %p187 = scmp.eq.s32.totalorder %s18, 0
      %p188 = por %p186, %p187
      %p189 = scmp.ne.s32.totalorder %s181, %s183
      %p190 = scmp.eq.s32.totalorder %s23, 2
      %p191 = por %p189, %p190
      %p192 = scmp.ne.s32.totalorder %s183, %s184
      %p193 = scmp.eq.s32.totalorder %s23, 0
      %p194 = por %p192, %p193
      %p195 = scmp.ne.s32.totalorder %s183, %s184
      %p196 = scmp.eq.s32.totalorder %s24, 2
      %p197 = por %p195, %p196
      %p199 = scmp.ne.s32.totalorder %s184, %s198
      %p200 = scmp.eq.s32.totalorder %s24, 0
      %p201 = por %p199, %p200
      %s202 = ssub.s32 %s25, %s37
      %p203 = scmp.eq.s32.totalorder %s202, 0
      %s205 = sadd.s32 %s204, 1
      %s206 = scalar_select %p203, %s204, %s205
      %p209 = pneg %p203
      %p210 = scmp.eq.s32.totalorder %s18, 2
      %p211 = por %p209, %p210
      %p212 = scmp.ne.s32.totalorder %s204, %s207
      %p213 = scmp.eq.s32.totalorder %s18, 0
      %p214 = por %p212, %p213
      %p215 = scmp.ne.s32.totalorder %s204, %s207
      %p216 = scmp.eq.s32.totalorder %s23, 2
      %p217 = por %p215, %p216
      %p218 = scmp.ne.s32.totalorder %s207, %s208
      %p219 = scmp.eq.s32.totalorder %s23, 0
      %p220 = por %p218, %p219
      %p221 = scmp.ne.s32.totalorder %s207, %s208
      %p222 = scmp.eq.s32.totalorder %s24, 2
      %p223 = por %p221, %p222
      %p225 = scmp.ne.s32.totalorder %s208, %s224
      %p226 = scmp.eq.s32.totalorder %s24, 0
      %p227 = por %p225, %p226
      %p228 = scmp.le.s32.totalorder 1, %s18
      %p229 = scmp.lt.s32.totalorder %s18, 4
      %p230 = pnand %p228, %p229
      %p231 = pneg %p230
      // Predicated region
      $region9: #{tpu_custom_call.1} parent=5 // pred_check
        _
      $region10: #{tpu_custom_call.1} parent=5 // pred_check_branch
        %233 = sbr.rel (%p230) target = $region12
      $region11: #{tpu_custom_call.1} parent=5 // pred_region
        %s234 = ssub.s32 %s18, 1
        // Predicated region
        $region13: #{tpu_custom_call.1} parent=11 // pred_check
          %p235 = pneg %p79
        $region14: #{tpu_custom_call.1} parent=11 // pred_check_branch
          %237 = sbr.rel (%p235) target = $region16
        $region15: #{tpu_custom_call.1} parent=11 // pred_region
          %239 = vsyncadd [#allocation5], 0
          %s240 = sshll.u32 %s1, 4
          %s241 = int_to_ptr.hbm [resolvable:$true] %s240
          %s242 = sshll.u32 [#allocation4], 4
          %s243 = int_to_ptr.vmem [resolvable:$true] %s242
          %248 = dma.hbm_to_vmem [thread:$0]  %s241, 256, %s243, [#allocation5], 128, 128, 8
        $region16: #{tpu_custom_call.1} parent=11 // pred_fallthru
          _
        // Predicated region
        $region17: #{tpu_custom_call.1} parent=11 // pred_check
          %p249 = pneg %p100
        $region18: #{tpu_custom_call.1} parent=11 // pred_check_branch
          %251 = sbr.rel (%p249) target = $region20
        $region19: #{tpu_custom_call.1} parent=11 // pred_region
          _
        $region20: #{tpu_custom_call.1} parent=11 // pred_fallthru
          _
        // Predicated region
        $region21: #{tpu_custom_call.1} parent=11 // pred_check
          %p252 = pneg %p152
        $region22: #{tpu_custom_call.1} parent=11 // pred_check_branch
          %254 = sbr.rel (%p252) target = $region24
        $region23: #{tpu_custom_call.1} parent=11 // pred_region
          %s255 = smul.u32 2, %s27
          %p256 = scmp.lt.s32.totalorder %s255, 1
          %s257 = scalar_select %p256, %s255, 1
          %s258 = smul.addr %s257, 8
          %s259 = scalar_lea.vmem %s4, %s258
          %s260 = smul.u32 2, %s27
        $region24: #{tpu_custom_call.1} parent=11 // pred_fallthru
          _
        // Predicated region
        $region25: #{tpu_custom_call.1} parent=11 // pred_check
          %p261 = pneg %p173
        $region26: #{tpu_custom_call.1} parent=11 // pred_check_branch
          %263 = sbr.rel (%p261) target = $region28
        $region27: #{tpu_custom_call.1} parent=11 // pred_region
          %265 = vsyncadd [#allocation8], 0
          %s266 = sshll.u32 %s5, 4
          %s267 = int_to_ptr.hbm [resolvable:$true] %s266
          %s268 = sshll.u32 [#allocation9], 4
          %s269 = int_to_ptr.vmem [resolvable:$true] %s268
          %274 = dma.hbm_to_vmem [thread:$0]  %s267, 2048, %s269, [#allocation8], 128, 128, 8
        $region28: #{tpu_custom_call.1} parent=11 // pred_fallthru
          _
        // Predicated region
        $region29: #{tpu_custom_call.1} parent=11 // pred_check
          %p275 = pneg %p194
        $region30: #{tpu_custom_call.1} parent=11 // pred_check_branch
          %277 = sbr.rel (%p275) target = $region32
        $region31: #{tpu_custom_call.1} parent=11 // pred_region
          _
        $region32: #{tpu_custom_call.1} parent=11 // pred_fallthru
          _
      $region12: #{tpu_custom_call.1} parent=5 // pred_fallthru
        _
      %p278 = scmp.lt.s32.totalorder %s18, 3
      // Predicated region
      $region33: #{tpu_custom_call.1} parent=5 // pred_check
        %p279 = pneg %p278
      $region34: #{tpu_custom_call.1} parent=5 // pred_check_branch
        %281 = sbr.rel (%p279) target = $region36
      $region35: #{tpu_custom_call.1} parent=5 // pred_region
        // Predicated region
        $region37: #{tpu_custom_call.1} parent=35 // pred_check
          %p282 = pneg %p52
        $region38: #{tpu_custom_call.1} parent=35 // pred_check_branch
          %284 = sbr.rel (%p282) target = $region40
        $region39: #{tpu_custom_call.1} parent=35 // pred_region
          %s285 = smul.u32 2, %s25
          %p286 = scmp.lt.s32.totalorder %s26, 2
          %s287 = scalar_select %p286, %s26, 2
          %p288 = scmp.lt.s32.totalorder %s285, 1
          %s289 = scalar_select %p288, %s285, 1
          %s290 = smul.addr %s287, 2
          %s291 = sadd.s32 %s289, %s290
          %s292 = smul.addr %s291, 4
          %s293 = scalar_lea.vmem %s0, %s292
          %s294 = smul.u32 2, %s25
        $region40: #{tpu_custom_call.1} parent=35 // pred_fallthru
          _
        // Predicated region
        $region41: #{tpu_custom_call.1} parent=35 // pred_check
          %p295 = pneg %p120
        $region42: #{tpu_custom_call.1} parent=35 // pred_check_branch
          %297 = sbr.rel (%p295) target = $region44
        $region43: #{tpu_custom_call.1} parent=35 // pred_region
          %s298 = sand.u32 %s18, 1
          %s299 = scalar_lea.sflag [#allocation8], %s298
          %s300 = sand.u32 %s110, 1
          %s301 = smul.addr %s300, 128
          %s302 = scalar_lea.vmem [#allocation7], %s301
          %304 = vsyncadd %s299, 0
          %s305 = smul.addr %s26, 16
          %s306 = smul.addr %s305, 8
          %s307 = scalar_lea.hbm %s3, %s306
          %s308 = sshll.u32 %s307, 4
          %s309 = int_to_ptr.hbm [resolvable:$true] %s308
          %s310 = sshll.u32 %s302, 4
          %s311 = int_to_ptr.vmem [resolvable:$true] %s310
          %316 = dma.hbm_to_vmem [thread:$0]  %s309, 2048, %s311, %s299, 128, 128, 8
        $region44: #{tpu_custom_call.1} parent=35 // pred_fallthru
          _
      $region36: #{tpu_custom_call.1} parent=5 // pred_fallthru
        _
      %p317 = scmp.le.s32.totalorder 1, %s18
      %p318 = scmp.lt.s32.totalorder %s18, 4
      %p319 = pnand %p317, %p318
      %p320 = pneg %p319
      // Predicated region
      $region45: #{tpu_custom_call.1} parent=5 // pred_check
        _
      $region46: #{tpu_custom_call.1} parent=5 // pred_check_branch
        %322 = sbr.rel (%p319) target = $region48
      $region47: #{tpu_custom_call.1} parent=5 // pred_region
        %s323 = ssub.s32 %s18, 1
        // Predicated region
        $region49: #{tpu_custom_call.1} parent=47 // pred_check
          %p324 = pneg %p79
        $region50: #{tpu_custom_call.1} parent=47 // pred_check_branch
          %326 = sbr.rel (%p324) target = $region52
        $region51: #{tpu_custom_call.1} parent=47 // pred_region
          %328 = dma.done [#allocation5], 256
        $region52: #{tpu_custom_call.1} parent=47 // pred_fallthru
          _
        %s329 = sand.u32 %s23, 1
        %s330 = scalar_lea.sflag [#allocation8], %s329
        %s331 = sand.u32 %s113, 1
        %s332 = smul.addr %s331, 128
        %s333 = scalar_lea.vmem [#allocation7], %s332
        // Predicated region
        $region53: #{tpu_custom_call.1} parent=47 // pred_check
          %p334 = pneg %p126
        $region54: #{tpu_custom_call.1} parent=47 // pred_check_branch
          %336 = sbr.rel (%p334) target = $region56
        $region55: #{tpu_custom_call.1} parent=47 // pred_region
          %338 = dma.done %s330, 2048
        $region56: #{tpu_custom_call.1} parent=47 // pred_fallthru
          _
        // Predicated region
        $region57: #{tpu_custom_call.1} parent=47 // pred_check
          %p339 = pneg %p173
        $region58: #{tpu_custom_call.1} parent=47 // pred_check_branch
          %341 = sbr.rel (%p339) target = $region60
        $region59: #{tpu_custom_call.1} parent=47 // pred_region
          %343 = dma.done [#allocation8], 2048
        $region60: #{tpu_custom_call.1} parent=47 // pred_fallthru
          _
        %s344 = smul.u32 2, %s27
        %p345 = scmp.lt.s32.totalorder %s28, 2
        %s346 = scalar_select %p345, %s28, 2
        %p347 = scmp.lt.s32.totalorder %s344, 1
        %s348 = scalar_select %p347, %s344, 1
        %s349 = smul.addr %s346, 2
        %s350 = sadd.s32 %s348, %s349
        %s351 = smul.addr %s350, 4
        %s352 = scalar_lea.vmem %s0, %s351
        %p353 = pneg %p58
        %p354 = pneg %p55
        %p355 = pneg %p79
        %p356 = pneg %p76
        %p357 = pneg %p100
        %p358 = pneg %p97
        %s359 = sand.u32 %s23, 1
        %s360 = scalar_lea.sflag [#allocation8], %s359
        %s361 = sand.u32 %s113, 1
        %s362 = smul.addr %s361, 128
        %s363 = scalar_lea.vmem [#allocation7], %s362
        %p364 = pneg %p126
        %p365 = pneg %p123
        %s366 = smul.u32 2, %s27
        %p367 = scmp.lt.s32.totalorder %s366, 1
        %s368 = scalar_select %p367, %s366, 1
        %s369 = smul.addr %s368, 8
        %s370 = scalar_lea.vmem %s4, %s369
        %p371 = pneg %p152
        %p372 = pneg %p149
        %p373 = pneg %p173
        %p374 = pneg %p170
        %p375 = pneg %p194
        %p376 = pneg %p191
        %p377 = pneg %p220
        %p378 = pneg %p217
        %s379 = smul.u32 2, %s27
        %p380 = scmp.lt.s32.totalorder %s28, 2
        %s381 = scalar_select %p380, %s28, 2
        %p382 = scmp.lt.s32.totalorder %s379, 1
        %s383 = scalar_select %p382, %s379, 1
        %s384 = smul.addr %s381, 2
        %s385 = sadd.s32 %s383, %s384
        %s386 = smul.addr %s385, 4
        %s387 = scalar_lea.vmem %s0, %s386
        %s388 = smul.u32 2, %s27
        %s389 = smul.u32 2, %s27
        %p390 = scmp.lt.s32.totalorder %s389, 1
        %s391 = scalar_select %p390, %s389, 1
        %s392 = smul.addr %s391, 8
        %s393 = scalar_lea.vmem %s4, %s392
        %s394 = smul.u32 2, %s27
        %s395 = smul.u32 2, %s27
        %p396 = scmp.eq.s32.totalorder %s28, 0
        // Predicated region
        $region61: #{tpu_custom_call.1} parent=47 // pred_check
          %p397 = pneg %p396
        $region62: #{tpu_custom_call.1} parent=47 // pred_check_branch
          %399 = sbr.rel (%p397) target = $region64
        $region63: #{tpu_custom_call.1} parent=47 // pred_region
          %v400 = vld [vmem:[#allocation4] sm:$0xff]
          %v401 = vld [vmem:[#allocation4 + $0x8] sm:$0xff]
          %v402 = vld [vmem:[%s2] sm:$0xff]
          %v403 = vld [vmem:[%s2 + $0x8] sm:$0xff]
          %405 = vset.pattern.permute.xlu0 0
          %406 = vperm.xlu0 %405, %v402
          %v407 = vpop.permute.xlu0 %406
          %410 = vset.pattern.permute.xlu0 0
          %411 = vperm.xlu0 %410, %v403
          %v412 = vpop.permute.xlu0 %411
          %v414 = vmul.f32 %v400, %v407
          %v415 = vmul.f32 %v401, %v412
          %416 = vst [vmem:[#allocation3] sm:$0xff] %v414
          %417 = vst [vmem:[#allocation3 + $0x8] sm:$0xff] %v415
          %418 = vst [vmem:[#allocation2] sm:$0xff] 0.0
          %419 = vst [vmem:[#allocation2 + $0x8] sm:$0xff] 0.0
        $region64: #{tpu_custom_call.1} parent=47 // pred_fallthru
          _
        %v420 = vld [vmem:[#allocation3] sm:$0xff]
        %v421 = vld [vmem:[#allocation3 + $0x8] sm:$0xff]
        %v422 = vld [vmem:[%s333] sm:$0xff]
        %v423 = vld [vmem:[%s333 + $0x8] sm:$0xff]
        %v424 = vld [vmem:[%s333 + $0x10] sm:$0xff]
        %v425 = vld [vmem:[%s333 + $0x18] sm:$0xff]
        %v426 = vld [vmem:[%s333 + $0x20] sm:$0xff]
        %v427 = vld [vmem:[%s333 + $0x28] sm:$0xff]
        %v428 = vld [vmem:[%s333 + $0x30] sm:$0xff]
        %v429 = vld [vmem:[%s333 + $0x38] sm:$0xff]
        %v430 = vld [vmem:[%s333 + $0x40] sm:$0xff]
        %v431 = vld [vmem:[%s333 + $0x48] sm:$0xff]
        %v432 = vld [vmem:[%s333 + $0x50] sm:$0xff]
        %v433 = vld [vmem:[%s333 + $0x58] sm:$0xff]
        %v434 = vld [vmem:[%s333 + $0x60] sm:$0xff]
        %v435 = vld [vmem:[%s333 + $0x68] sm:$0xff]
        %v436 = vld [vmem:[%s333 + $0x70] sm:$0xff]
        %v437 = vld [vmem:[%s333 + $0x78] sm:$0xff]
        %438 = vmatpush.msra.mxu0 %v437
        %439 = vmatpush.msra.mxu0 %v436
        %440 = vmatpush.msra.mxu0 %v435
        %441 = vmatpush.msra.mxu0 %v434
        %442 = vmatpush.msra.mxu0 %v433
        %443 = vmatpush.msra.mxu0 %v432
        %444 = vmatpush.msra.mxu0 %v431
        %445 = vmatpush.msra.mxu0 %v430
        %446 = vmatpush.msra.mxu0 %v429
        %447 = vmatpush.msra.mxu0 %v428
        %448 = vmatpush.msra.mxu0 %v427
        %449 = vmatpush.msra.mxu0 %v426
        %450 = vmatpush.msra.mxu0 %v425
        %451 = vmatpush.msra.mxu0 %v424
        %452 = vmatpush.msra.mxu0 %v423
        %453 = vmatpush.msra.mxu0 %v422
        %454 = vmatmul.f32.gmra.mxu0 %v420
        %v455 = vpop.f32.mrf.mxu0
        %v456 = vadd.f32 0.0, %v455
        %457 = vmatmul.f32.gmra.mxu0 %v421
        %v458 = vpop.f32.mrf.mxu0
        %v459 = vadd.f32 0.0, %v458
        %460 = vdwg.mxu0
        %v461 = vld [vmem:[%s387] sm:$0xf]
        %v462 = vld [vmem:[%s387 + $0x4] sm:$0xf]
        %v463 = vunpack.c.l.bf16 %v461
        %v464 = vunpack.c.l.bf16 %v462
        %vm465 = vcmask 130048
        %v467 = vsel %vm465, %v463, 0
        %v470 = vsel %vm465, %v464, 0
        %472 = vmatpush.msra.mxu0 0.0
        %473 = vmatpush.msra.mxu0 0.0
        %474 = vmatpush.msra.mxu0 0.0
        %475 = vmatpush.msra.mxu0 0.0
        %476 = vmatpush.msra.mxu0 0.0
        %477 = vmatpush.msra.mxu0 0.0
        %478 = vmatpush.msra.mxu0 0.0
        %479 = vmatpush.msra.mxu0 0.0
        %480 = vmatpush.msra.mxu0 0.0
        %481 = vmatpush.msra.mxu0 0.0
        %482 = vmatpush.msra.mxu0 0.0
        %483 = vmatpush.msra.mxu0 0.0
        %484 = vmatpush.msra.mxu0 0.0
        %485 = vmatpush.msra.mxu0 0.0
        %486 = vmatpush.msra.mxu0 %v459
        %487 = vmatpush.msra.mxu0 %v456
        %488 = vmatmul.f32.gmra.mxu0 %v467
        %v489 = vpop.f32.mrf.mxu0
        %v490 = vadd.f32 0.0, %v489
        %491 = vmatmul.f32.gmra.mxu0 %v470
        %v492 = vpop.f32.mrf.mxu0
        %v493 = vadd.f32 0.0, %v492
        %494 = vdwg.mxu0
        %v495 = vld [vmem:[#allocation2] sm:$0xff]
        %v496 = vld [vmem:[#allocation2 + $0x8] sm:$0xff]
        %v497 = vadd.f32 %v495, %v490
        %v498 = vadd.f32 %v496, %v493
        %499 = vst [vmem:[#allocation2] sm:$0xff] %v497
        %500 = vst [vmem:[#allocation2 + $0x8] sm:$0xff] %v498
        %p501 = scmp.eq.s32.totalorder %s28, 2
        // Predicated region
        $region65: #{tpu_custom_call.1} parent=47 // pred_check
          %p502 = pneg %p501
        $region66: #{tpu_custom_call.1} parent=47 // pred_check_branch
          %504 = sbr.rel (%p502) target = $region68
        $region67: #{tpu_custom_call.1} parent=47 // pred_region
          %v505 = vld [vmem:[#allocation2] sm:$0xff]
          %v506 = vld [vmem:[#allocation2 + $0x8] sm:$0xff]
          %v507 = vld [vmem:[%s393] sm:$0xff]
          %v508 = vld [vmem:[%s393 + $0x8] sm:$0xff]
          %510 = vset.pattern.permute.xlu0 0
          %511 = vperm.xlu0 %510, %v507
          %v512 = vpop.permute.xlu0 %511
          %515 = vset.pattern.permute.xlu0 0
          %516 = vperm.xlu0 %515, %v508
          %v517 = vpop.permute.xlu0 %516
          %v519 = vmul.f32 %v505, %v512
          %v520 = vmul.f32 %v506, %v517
          %vm521 = vcmp.gt.f32.partialorder %v519, 0.0
          %vm522 = vcmp.gt.f32.partialorder %v520, 0.0
          %v523 = vmul.f32 %v519, 0.1
          %v524 = vmul.f32 %v520, 0.1
          %v525 = vsel %vm521, %v519, %v523
          %v526 = vsel %vm522, %v520, %v524
          %v527 = vld [vmem:[#allocation9] sm:$0xff]
          %v528 = vld [vmem:[#allocation9 + $0x8] sm:$0xff]
          %v529 = vld [vmem:[#allocation9 + $0x10] sm:$0xff]
          %v530 = vld [vmem:[#allocation9 + $0x18] sm:$0xff]
          %v531 = vld [vmem:[#allocation9 + $0x20] sm:$0xff]
          %v532 = vld [vmem:[#allocation9 + $0x28] sm:$0xff]
          %v533 = vld [vmem:[#allocation9 + $0x30] sm:$0xff]
          %v534 = vld [vmem:[#allocation9 + $0x38] sm:$0xff]
          %v535 = vld [vmem:[#allocation9 + $0x40] sm:$0xff]
          %v536 = vld [vmem:[#allocation9 + $0x48] sm:$0xff]
          %v537 = vld [vmem:[#allocation9 + $0x50] sm:$0xff]
          %v538 = vld [vmem:[#allocation9 + $0x58] sm:$0xff]
          %v539 = vld [vmem:[#allocation9 + $0x60] sm:$0xff]
          %v540 = vld [vmem:[#allocation9 + $0x68] sm:$0xff]
          %v541 = vld [vmem:[#allocation9 + $0x70] sm:$0xff]
          %v542 = vld [vmem:[#allocation9 + $0x78] sm:$0xff]
          %v543 = vld [vmem:[%s6] sm:$0x1]
          %v545 = vperm.slane %v543, 0
          %547 = vmatpush.msra.mxu0 %v542
          %548 = vmatpush.msra.mxu0 %v541
          %549 = vmatpush.msra.mxu0 %v540
          %550 = vmatpush.msra.mxu0 %v539
          %551 = vmatpush.msra.mxu0 %v538
          %552 = vmatpush.msra.mxu0 %v537
          %553 = vmatpush.msra.mxu0 %v536
          %554 = vmatpush.msra.mxu0 %v535
          %555 = vmatpush.msra.mxu0 %v534
          %556 = vmatpush.msra.mxu0 %v533
          %557 = vmatpush.msra.mxu0 %v532
          %558 = vmatpush.msra.mxu0 %v531
          %559 = vmatpush.msra.mxu0 %v530
          %560 = vmatpush.msra.mxu0 %v529
          %561 = vmatpush.msra.mxu0 %v528
          %562 = vmatpush.msra.mxu0 %v527
          %563 = vmatmul.f32.gmra.mxu0 %v525
          %v564 = vpop.f32.mrf.mxu0
          %v565 = vadd.f32 %v545, %v564
          %566 = vmatmul.f32.gmra.mxu0 %v526
          %v567 = vpop.f32.mrf.mxu0
          %v568 = vadd.f32 %v545, %v567
          %569 = vdwg.mxu0
          %570 = vst [vmem:[#allocation10] sm:$0xff] %v565
          %571 = vst [vmem:[#allocation10 + $0x8] sm:$0xff] %v568
        $region68: #{tpu_custom_call.1} parent=47 // pred_fallthru
          _
        // Predicated region
        $region69: #{tpu_custom_call.1} parent=47 // pred_check
          %p572 = pneg %p217
        $region70: #{tpu_custom_call.1} parent=47 // pred_check_branch
          %574 = sbr.rel (%p572) target = $region72
        $region71: #{tpu_custom_call.1} parent=47 // pred_region
          %s575 = smul.u32 2, %s27
          %577 = vsyncadd [#allocation6], 0
          %s578 = smul.addr %s575, 8
          %s579 = scalar_lea.hbm %s7, %s578
          %s580 = sshll.u32 [#allocation10], 4
          %s581 = int_to_ptr.vmem [resolvable:$true] %s580
          %s582 = sshll.u32 %s579, 4
          %s583 = int_to_ptr.hbm [resolvable:$true] %s582
          %588 = dma.vmem_to_hbm [thread:$0]  %s581, 256, %s583, [#allocation6], 128, 128, 8
        $region72: #{tpu_custom_call.1} parent=47 // pred_fallthru
          _
        // Predicated region
        $region73: #{tpu_custom_call.1} parent=47 // pred_check
          %p589 = pneg %p217
        $region74: #{tpu_custom_call.1} parent=47 // pred_check_branch
          %591 = sbr.rel (%p589) target = $region76
        $region75: #{tpu_custom_call.1} parent=47 // pred_region
          %593 = dma.done [#allocation6], 256
        $region76: #{tpu_custom_call.1} parent=47 // pred_fallthru
          _
      $region48: #{tpu_custom_call.1} parent=5 // pred_fallthru
        _
      %p594 = scmp.le.s32.totalorder 2, %s18
      // Predicated region
      $region77: #{tpu_custom_call.1} parent=5 // pred_check
        %p595 = pneg %p594
      $region78: #{tpu_custom_call.1} parent=5 // pred_check_branch
        %597 = sbr.rel (%p595) target = $region80
      $region79: #{tpu_custom_call.1} parent=5 // pred_region
        %s598 = ssub.s32 %s18, 2
      $region80: #{tpu_custom_call.1} parent=5 // pred_fallthru
        _
    $region6: #{tpu_custom_call.1} parent=1 // loop_footer
      %s22 = sadd.s32 1, %s18
    $region7: #{tpu_custom_call.1} parent=1 // loop_footer_branch
      %17 = sbr.rel target = $region3
    $region8: #{tpu_custom_call.1} parent=1 // loop_exit
      _
    %599 = vsyncpa [#allocation5], 1
    %s600 = scalar_lea.sflag [#allocation5], 1
    %601 = vsyncpa %s600, 1
    %602 = vsyncpa [#allocation8], 1
    %s603 = scalar_lea.sflag [#allocation8], 1
    %604 = vsyncpa %s603, 1
    %605 = vsyncpa [#allocation6], 1
    %s606 = scalar_lea.sflag [#allocation6], 1
    %607 = vsyncpa %s606, 1

</llo_original>
